<compile_context>
chip_gen: v7x
topology: tpu7x:2x2x1
jax: 0.10.0
libtpu: 0.0.40
codegen_flags: <defaults>
</compile_context>

<pallas_src>
import functools

import jax
import jax.numpy as jnp
from jax.experimental import pallas as pl
from jax.experimental.pallas import tpu as pltpu


_LANE = 128      # lane width: pad N to this for dense vst + full MXU width
_SUBLANE = 8     # sublane multiple for the M (batch) tile


def _round_up(x, m):
    return (x + m - 1) // m * m


def _linear_kernel(x_ref, w_ref, b_ref, o_ref, *, compute_dtype):
    # In-kernel cast of the x tile (VPU) -> MXU matmul with f32 accumulation
    # -> f32 bias add (VPU) -> single lane-dense store in the output dtype.
    x = x_ref[...].astype(compute_dtype)
    acc = jnp.dot(x, w_ref[...], preferred_element_type=jnp.float32)
    o_ref[...] = (acc + b_ref[...]).astype(o_ref.dtype)


def prepare_speed_to_feature_params(weight, bias, compute_dtype=jnp.bfloat16):
    """One-time (init-time) packing of PyTorch-layout nn.Linear parameters.

    weight: (output_dim, input_dim)   -- PyTorch convention
    bias:   (output_dim,)

    Returns:
      w_t: (input_dim, N_pad) compute_dtype -- transposed, N zero-padded to 128
      b:   (1, N_pad) float32               -- N zero-padded to 128
    Transpose / pad / cast happen here exactly once, never per call.
    """
    output_dim, input_dim = weight.shape
    n_pad = _round_up(output_dim, _LANE)
    w_t = jnp.transpose(weight)                               # (K, N)
    w_t = jnp.pad(w_t, ((0, 0), (0, n_pad - output_dim)))     # pad N only
    w_t = w_t.astype(compute_dtype)
    b = jnp.pad(bias.astype(jnp.float32), (0, n_pad - output_dim))
    return w_t, b.reshape(1, n_pad)


def _choose_tm(batch, tm_max):
    tm = max(_SUBLANE,
             min(_round_up(batch, _SUBLANE), _round_up(tm_max, _SUBLANE)))
    m_tiles = pl.cdiv(batch, tm)
    # Rebalance so tiles are ~even: avoids a near-empty last tile and keeps
    # multiple comparable tiles for v7x's two TensorCores when batch allows.
    tm = _round_up(pl.cdiv(batch, m_tiles), _SUBLANE)
    m_tiles = pl.cdiv(batch, tm)
    return tm, m_tiles


def speed_to_feature_padded(x, w_t, bias_padded, *, tm_max=1024):
    """Lane-padded result slab (batch, N_pad) = x @ W.T + b.

    Consumers that can index the valid columns themselves should use this
    directly and skip the slice in `speed_to_feature`.
    """
    batch, input_dim = x.shape
    k, n_pad = w_t.shape
    assert k == input_dim, (k, input_dim)

    tm, m_tiles = _choose_tm(batch, tm_max)
    compute_dtype = w_t.dtype
    out_dtype = x.dtype
    x_itemsize = jnp.dtype(x.dtype).itemsize
    w_itemsize = jnp.dtype(w_t.dtype).itemsize
    out_itemsize = jnp.dtype(out_dtype).itemsize

    # Advisory cost for XLA's scheduler (true sizes, not padded-up ones).
    cost = pl.CostEstimate(
        flops=2 * batch * input_dim * n_pad,
        transcendentals=0,
        bytes_accessed=(batch * input_dim * x_itemsize       # x
                        + input_dim * n_pad * w_itemsize     # weight
                        + n_pad * 4                          # bias
                        + batch * n_pad * out_itemsize))     # output

    # Explicit VMEM budget (v5e's scoped default is only 16 MiB):
    #   double-buffered x + output tiles, single-buffered resident weight+bias.
    vmem_needed = (2 * tm * input_dim * x_itemsize
                   + 2 * tm * n_pad * out_itemsize
                   + input_dim * n_pad * w_itemsize
                   + n_pad * 4)
    vmem_limit = int(min(max(2 * vmem_needed + (2 << 20), 16 << 20), 100 << 20))

    kernel = functools.partial(_linear_kernel, compute_dtype=compute_dtype)

    return pl.pallas_call(
        kernel,
        out_shape=jax.ShapeDtypeStruct((batch, n_pad), out_dtype),
        grid_spec=pltpu.PrefetchScalarGridSpec(
            num_scalar_prefetch=0,
            grid=(m_tiles,),
            in_specs=[
                # x: tiled along M only, software-pipelined by Pallas.  K
                # equals the full array dim, so no wrapper-side pad/cast is
                # needed; the ragged last M tile is safe (OOB rows are never
                # written back).
                pl.BlockSpec((tm, input_dim), lambda i: (i, 0)),
                # weight: constant index_map -> fetched once, VMEM-resident;
                # single-buffered (no point double-buffering a constant).
                pl.BlockSpec((input_dim, n_pad), lambda i: (0, 0),
                             pipeline_mode=pl.Buffered(1)),
                # bias: likewise resident + single-buffered.
                pl.BlockSpec((1, n_pad), lambda i: (0, 0),
                             pipeline_mode=pl.Buffered(1)),
            ],
            out_specs=pl.BlockSpec((tm, n_pad), lambda i: (i, 0)),
        ),
        compiler_params=pltpu.CompilerParams(
            dimension_semantics=("parallel",),   # shards M tiles across TCs on v7x
            vmem_limit_bytes=vmem_limit),
        cost_estimate=cost,
    )(x, w_t, bias_padded)


def speed_to_feature(x, w_t, bias_padded, output_dim, *, tm_max=1024):
    """Forward pass of SpeedToFeature: (batch, input_dim) -> (batch, output_dim)."""
    out = speed_to_feature_padded(x, w_t, bias_padded, tm_max=tm_max)
    # Only the lane padding (output_dim -> 128) is trimmed; no M slice, no cast.
    return out[:, :output_dim]


if __name__ == "__main__":
    # Small shapes implied by the module: a batch of "speed" vectors -> features.
    batch, input_dim, output_dim = 8, 32, 64

    key = jax.random.PRNGKey(0)
    kx, kw, kb = jax.random.split(key, 3)

    x = jax.random.normal(kx, (batch, input_dim), dtype=jnp.float32)

    # Deterministic parameter init (mimics nn.Linear's uniform(-1/sqrt(fan_in),...)).
    bound = 1.0 / (input_dim ** 0.5)
    weight = jax.random.uniform(kw, (output_dim, input_dim),
                                minval=-bound, maxval=bound, dtype=jnp.float32)
    bias = jax.random.uniform(kb, (output_dim,),
                              minval=-bound, maxval=bound, dtype=jnp.float32)

    # One-time parameter packing (transpose + N-pad + bf16) — hoisted out of the call.
    w_t, b_padded = prepare_speed_to_feature_params(weight, bias)

    out = speed_to_feature(x, w_t, b_padded, output_dim)
    out = jax.block_until_ready(out)

    # Sanity check against plain JAX reference (looser tolerance: bf16 operands).
    ref = x @ weight.T + bias
    assert out.shape == (batch, output_dim), out.shape
    err = float(jnp.max(jnp.abs(out - ref)))
    assert jnp.allclose(out, ref, atol=2e-2, rtol=2e-2), err

    print("KERNEL_OK")
</pallas_src>

<mosaic_0001>
module attributes {stable_mosaic.version = 11 : i64} {
  func.func @_linear_kernel(%arg0: i32, %arg1: memref<8x32xf32, #tpu.memory_space<vmem>>, %arg2: memref<32x128xbf16, #tpu.memory_space<vmem>>, %arg3: memref<1x128xf32, #tpu.memory_space<vmem>>, %arg4: memref<8x128xf32, #tpu.memory_space<vmem>>) attributes {dimension_semantics = [#tpu.dimension_semantics<parallel>], iteration_bounds = array<i64: 1>, scalar_prefetch = 0 : i64, scratch_operands = 0 : i64, tpu.core_type = #tpu.core_type<tc>, window_params = [{transform_indices = @transform_0, window_bounds = array<i64: 8, 32>}, {pipeline_mode = #tpu.pipeline_mode<synchronous>, transform_indices = @transform_1, window_bounds = array<i64: 32, 128>}, {pipeline_mode = #tpu.pipeline_mode<synchronous>, transform_indices = @transform_2, window_bounds = array<i64: 1, 128>}, {transform_indices = @transform_3, window_bounds = array<i64: 8, 128>}]} {
    %c0 = arith.constant 0 : index
    %c0_0 = arith.constant 0 : index
    %0 = vector.load %arg1[%c0, %c0_0] : memref<8x32xf32, #tpu.memory_space<vmem>>, vector<8x32xf32>
    %1 = arith.truncf %0 : vector<8x32xf32> to vector<8x32xbf16>
    %c0_1 = arith.constant 0 : index
    %c0_2 = arith.constant 0 : index
    %2 = vector.load %arg2[%c0_1, %c0_2] : memref<32x128xbf16, #tpu.memory_space<vmem>>, vector<32x128xbf16>
    %cst = arith.constant dense<0.000000e+00> : vector<8x128xf32>
    %3 = tpu.matmul %1, %2, %cst {dimension_numbers = #tpu.dot_dimension_numbers<[1], [0], [0], [1], [0, 0, 1, 1], [], []>} : vector<8x32xbf16>, vector<32x128xbf16>, vector<8x128xf32> -> vector<8x128xf32>
    %c0_3 = arith.constant 0 : index
    %c0_4 = arith.constant 0 : index
    %4 = vector.load %arg3[%c0_3, %c0_4] : memref<1x128xf32, #tpu.memory_space<vmem>>, vector<1x128xf32>
    %5 = vector.broadcast %4 : vector<1x128xf32> to vector<8x128xf32>
    %6 = arith.addf %3, %5 : vector<8x128xf32>
    %c0_5 = arith.constant 0 : index
    %c0_6 = arith.constant 0 : index
    %7 = vector.load %arg4[%c0_5, %c0_6] : memref<8x128xf32, #tpu.memory_space<vmem>>, vector<8x128xf32>
    tpu.vector_store %arg4[%c0_5, %c0_6], %6 {strides = array<i32>} : memref<8x128xf32, #tpu.memory_space<vmem>>, vector<8x128xf32>,
    return
  }
  func.func @transform_0(%arg0: i32) -> (i32, i32) {
    %c0_i32 = arith.constant 0 : i32
    %c0_i32_0 = arith.constant 0 : i32
    return %arg0, %c0_i32 : i32, i32
  }
  func.func @transform_1(%arg0: i32) -> (i32, i32) {
    %c0_i32 = arith.constant 0 : i32
    %c0_i32_0 = arith.constant 0 : i32
    %c0_i32_1 = arith.constant 0 : i32
    return %c0_i32, %c0_i32_0 : i32, i32
  }
  func.func @transform_2(%arg0: i32) -> (i32, i32) {
    %c0_i32 = arith.constant 0 : i32
    %c0_i32_0 = arith.constant 0 : i32
    %c0_i32_1 = arith.constant 0 : i32
    return %c0_i32, %c0_i32_0 : i32, i32
  }
  func.func @transform_3(%arg0: i32) -> (i32, i32) {
    %c0_i32 = arith.constant 0 : i32
    %c0_i32_0 = arith.constant 0 : i32
    return %arg0, %c0_i32 : i32, i32
  }
}

</mosaic_0001>

<llo_original>
// kernel: tpu_custom_call.1
$region0: #{tpu_custom_call.1}
  #allocation0 [shape = 'u32[]', space=smem, size = 0x4, offset = 0x4, fixed_abs, tag = 'smem constant byte address 0x4 - core index']
  #allocation1 [shape = 'u32[144,128]{1,0:T(1,128)}', space=vmem, size = 0x12000, scoped, tag = 'internal scratch']
  %s0 = inlined_call_operand.hbm [shape: f32[8,32], index: 0, kind: input, shape index: {}]
  %s1 = inlined_call_operand.hbm [shape: bf16[32,128], index: 1, kind: input, shape index: {}]
  %s2 = inlined_call_operand.vmem [shape: f32[1,128], index: 2, kind: input, shape index: {}]
  %s3 = inlined_call_operand.hbm [shape: f32[8,128], index: 3, kind: output, shape index: {}]
  %s4 = sld [smem:[#allocation0]]
  $region30: #{tpu_custom_call.1} parent=0
    _
  %s6 = ssub.s32 1, %s4
  %s7 = scalar_select 0, %s6, %s4
  $region1: #{tpu_custom_call.1} parent=0
    #allocation2 [shape = 'u8[4096]{0}', space=vmem, size = 0x1000, scoped, tag = 'input window, operand 0, single buffered']
    #allocation3 [shape = 's32[1]{0}', space=sflag, size = 0x4, scoped, tag = 'scoped memory for tpu_custom_call.1']
    #allocation4 [shape = 's32[1]{0}', space=sflag, size = 0x4, scoped, tag = 'scoped memory for tpu_custom_call.1']
    #allocation5 [shape = 'u8[8192]{0}', space=vmem, size = 0x2000, scoped, tag = 'input window, operand 1, single buffered']
    #allocation6 [shape = 's32[1]{0}', space=sflag, size = 0x4, scoped, tag = 'scoped memory for tpu_custom_call.1']
    #allocation7 [shape = 'u8[4096]{0}', space=vmem, size = 0x1000, scoped, tag = 'output window, operand 0, single buffered']
    %8 = vsyncpa [#allocation3], 0
    %9 = vsyncpa [#allocation6], 0
    %10 = vsyncpa [#allocation4], 0
    // Predicated region
    $region2: #{tpu_custom_call.1} parent=1 // pred_check
      _
    $region3: #{tpu_custom_call.1} parent=1 // pred_check_branch
      %12 = sbr.rel (0) target = $region5
    $region4: #{tpu_custom_call.1} parent=1 // pred_region
      %s14 = ssub.s32 128, 128
      %15 = vsyncadd [#allocation3], %s14
      %s17 = sshll.u32 [#allocation2], 4
      %s18 = int_to_ptr.vmem [resolvable:$true] %s17
      %20 = dma.hbm_to_vmem [thread:$0]  %s0, 128, %s18, [#allocation3]
    $region5: #{tpu_custom_call.1} parent=1 // pred_fallthru
      _
    // Predicated region
    $region6: #{tpu_custom_call.1} parent=1 // pred_check
      _
    $region7: #{tpu_custom_call.1} parent=1 // pred_check_branch
      %22 = sbr.rel (0) target = $region9
    $region8: #{tpu_custom_call.1} parent=1 // pred_region
      %s24 = ssub.s32 256, 256
      %25 = vsyncadd [#allocation6], %s24
      %s26 = sshll.u32 [#allocation5], 4
      %s27 = int_to_ptr.vmem [resolvable:$true] %s26
      %32 = dma.hbm_to_vmem [thread:$0]  %s1, 256, %s27, [#allocation6], 64, 64, 4
    $region9: #{tpu_custom_call.1} parent=1 // pred_fallthru
      _
    // Predicated region
    $region10: #{tpu_custom_call.1} parent=1 // pred_check
      _
    $region11: #{tpu_custom_call.1} parent=1 // pred_check_branch
      %34 = sbr.rel (0) target = $region13
    $region12: #{tpu_custom_call.1} parent=1 // pred_region
      _
    $region13: #{tpu_custom_call.1} parent=1 // pred_fallthru
      _
    // Predicated region
    $region14: #{tpu_custom_call.1} parent=1 // pred_check
      _
    $region15: #{tpu_custom_call.1} parent=1 // pred_check_branch
      %36 = sbr.rel (0) target = $region17
    $region16: #{tpu_custom_call.1} parent=1 // pred_region
      %37 = dma.done [#allocation3], 128
    $region17: #{tpu_custom_call.1} parent=1 // pred_fallthru
      _
    // Predicated region
    $region18: #{tpu_custom_call.1} parent=1 // pred_check
      _
    $region19: #{tpu_custom_call.1} parent=1 // pred_check_branch
      %39 = sbr.rel (0) target = $region21
    $region20: #{tpu_custom_call.1} parent=1 // pred_region
      %40 = dma.done [#allocation6], 256
    $region21: #{tpu_custom_call.1} parent=1 // pred_fallthru
      _
    %v42 = vld [vmem:[#allocation2] sm:$0xff]
    %v43 = vpack.c.bf16 %v42, %v42
    %v44 = vld [vmem:[#allocation5] sm:$0xf]
    %v45 = vld [vmem:[#allocation5 + $0x4] sm:$0xf]
    %v46 = vld [vmem:[#allocation5 + $0x8] sm:$0xf]
    %v47 = vld [vmem:[#allocation5 + $0xc] sm:$0xf]
    %v48 = vld [vmem:[%s2] sm:$0x1]
    %v50 = vlaneseq
    %v51 = vshrl.u32 %v50, 7
    %v52 = vsub.s32 0, %v51
    %v53 = vrot.slane %v48, %v52
    %v59 = vunpack.c.l.b16 %v44
    %v60 = vunpack.c.l.b16 %v45
    %v61 = vunpack.c.l.b16 %v46
    %v62 = vunpack.c.l.b16 %v47
    %v63 = vpack.c.b16 %v60, %v59
    %v64 = vpack.c.b16 %v62, %v61
    %vm67 = vcmask 261120
    %v69 = vsel %vm67, %v43, 0
    %71 = vmatprep.subr.bf16.mxu0 0
    %72 = vmatpush1.bf16.msra.mxu0 %v63
    %73 = vmatprep.subr.bf16.mxu0 0
    %74 = vmatpush1.bf16.msra.mxu0 %v64
    %75 = vmatprep.subr.bf16.mxu0 0
    %76 = vmatpush1.bf16.msra.mxu0 0
    %77 = vmatprep.subr.bf16.mxu0 0
    %78 = vmatpush1.bf16.msra.mxu0 0
    %79 = vmatprep.subr.bf16.mxu0 0
    %80 = vmatpush1.bf16.msra.mxu0 0
    %81 = vmatprep.subr.bf16.mxu0 0
    %82 = vmatpush1.bf16.msra.mxu0 0
    %83 = vmatprep.subr.bf16.mxu0 0
    %84 = vmatpush1.bf16.msra.mxu0 0
    %85 = vmatprep.subr.bf16.mxu0 0
    %86 = vmatpush1.bf16.msra.mxu0 0
    %87 = vmatprep.subr.bf16.mxu0 0
    %88 = vmatpush1.bf16.msra.mxu0 0
    %89 = vmatprep.subr.bf16.mxu0 0
    %90 = vmatpush1.bf16.msra.mxu0 0
    %91 = vmatprep.subr.bf16.mxu0 0
    %92 = vmatpush1.bf16.msra.mxu0 0
    %93 = vmatprep.subr.bf16.mxu0 0
    %94 = vmatpush1.bf16.msra.mxu0 0
    %95 = vmatprep.subr.bf16.mxu0 0
    %96 = vmatpush1.bf16.msra.mxu0 0
    %97 = vmatprep.subr.bf16.mxu0 0
    %98 = vmatpush1.bf16.msra.mxu0 0
    %99 = vmatprep.subr.bf16.mxu0 0
    %100 = vmatpush1.bf16.msra.mxu0 0
    %101 = vmatprep.subr.bf16.mxu0 0
    %102 = vmatpush1.bf16.msra.mxu0 0
    %103 = vmatprep.mubr.bf16.mxu0 0
    %104 = vmatmul.mubr.bf16.gmra.mrb[0].mxu0 %v69
    %v105 = vpop.f32.mrb[0].mxu0
    %v106 = vadd.f32 %v53, %v105
    %v107 = vpop.f32.mrb[0].mxu0
    %v108 = vpop.f32.mrb[0].mxu0
    %v109 = vpop.f32.mrb[0].mxu0
    %110 = vdwg.mxu0
    %111 = vst [vmem:[#allocation7] sm:$0xff] %v106
    // Predicated region
    $region22: #{tpu_custom_call.1} parent=1 // pred_check
      _
    $region23: #{tpu_custom_call.1} parent=1 // pred_check_branch
      %113 = sbr.rel (0) target = $region25
    $region24: #{tpu_custom_call.1} parent=1 // pred_region
      %s115 = ssub.s32 128, 128
      %116 = vsyncadd [#allocation4], %s115
      %s118 = sshll.u32 [#allocation7], 4
      %s119 = int_to_ptr.vmem [resolvable:$true] %s118
      %121 = dma.vmem_to_hbm [thread:$0]  %s119, 128, %s3, [#allocation4]
    $region25: #{tpu_custom_call.1} parent=1 // pred_fallthru
      _
    // Predicated region
    $region26: #{tpu_custom_call.1} parent=1 // pred_check
      _
    $region27: #{tpu_custom_call.1} parent=1 // pred_check_branch
      %123 = sbr.rel (0) target = $region29
    $region28: #{tpu_custom_call.1} parent=1 // pred_region
      %124 = dma.done [#allocation4], 128
    $region29: #{tpu_custom_call.1} parent=1 // pred_fallthru
      _
    %125 = vsyncpa [#allocation3], 1
    %126 = vsyncpa [#allocation6], 1
    %127 = vsyncpa [#allocation4], 1

</llo_original>
